<compile_context>
chip_gen: v5e
topology: v5e:2x2
jax: 0.10.0
libtpu: 0.0.40
codegen_flags: <defaults>
</compile_context>

<pallas_src>
import functools

import jax
import jax.numpy as jnp
from jax.experimental import pallas as pl
from jax.experimental.pallas import tpu as pltpu


_VMEM_LIMIT_BYTES = 32 * 1024 * 1024  # safe on v5e/v6e (128 MiB) and v7x (64 MiB)


def _round_up(x, m):
    return (x + m - 1) // m * m


def _band_matrix(weight, c_pad):
    """(c_pad, c_pad) f32 band matrix M with M[src, dst] = w[src - dst + pad].

    conv[dst] = sum_src y[src] * M[src, dst]  ==  Conv1d(1, 1, k,
    padding=(k-1)//2, bias=False) cross-correlation along the channel axis with
    zero padding (padded channels pool to 0, preserving the zero-pad semantics).
    Built once in the wrapper; VMEM cost is C_pad^2 * 4 B (1 MiB at C=512).
    """
    k = weight.shape[0]
    pad = (k - 1) // 2
    src = jnp.arange(c_pad)[:, None]
    dst = jnp.arange(c_pad)[None, :]
    tap = src - dst + pad
    valid = (tap >= 0) & (tap < k)
    w = weight.astype(jnp.float32)
    return jnp.where(valid, w[jnp.clip(tap, 0, k - 1)], 0.0)


def _pool_gate_kernel(band_ref, x_ref, gate_ref, acc_ref, *, inv_hw):
    # band_ref: (C_pad, C_pad) f32 constant (index_map -> (0, 0), never refetched)
    # x_ref:    (1, C_pad, TILE_HW) block, native dtype
    # gate_ref: (1, C_pad, 1) output, native dtype (same block across the HW axis)
    # acc_ref:  (1, C_pad) f32 scratch -- spatial-sum accumulator
    t = pl.program_id(1)

    @pl.when(t == 0)
    def _init():
        acc_ref[...] = jnp.zeros_like(acc_ref)

    # Only the pooled C-vector is kept in f32; the tile is consumed by the
    # reduction in its native dtype (no full-tile f32 copy).
    acc_ref[...] += jnp.sum(x_ref[...], axis=-1, dtype=jnp.float32)

    @pl.when(t == pl.num_programs(1) - 1)
    def _finalize():
        y = acc_ref[...] * inv_hw                                   # (1, C_pad) mean
        conv = jnp.dot(y, band_ref[...], preferred_element_type=jnp.float32)
        gate_ref[...] = jax.nn.sigmoid(conv)[:, :, None].astype(gate_ref.dtype)


def _scale_kernel(gate_ref, x_ref, o_ref):
    # Pure streaming broadcast-multiply in the input's native dtype.
    o_ref[...] = x_ref[...] * gate_ref[...]


def _fused_kernel(band_ref, x_ref, o_ref, *, inv_hw):
    # Single pass per batch (whole (1, C_pad, HW_pad) slab resident) -- only used
    # for small slabs; saves one HBM read of x versus the two-stage form.
    x = x_ref[...]                                                  # native dtype
    y = jnp.sum(x, axis=-1, dtype=jnp.float32) * inv_hw             # (1, C_pad)
    conv = jnp.dot(y, band_ref[...], preferred_element_type=jnp.float32)
    gate = jax.nn.sigmoid(conv).astype(x.dtype)                     # (1, C_pad)
    o_ref[...] = x * gate[:, :, None]


def eca_forward(x, weight, *, mode="auto", fused_max_slab_bytes=2 * 1024 * 1024,
                target_block_bytes=1024 * 1024):
    """ECA forward. x: (B, C, H, W); weight: (k,) Conv1d weight (from (1,1,k))."""
    B, C, H, W = x.shape
    HW = H * W
    itemsize = jnp.dtype(x.dtype).itemsize

    # Layout padding: channels to a full packed-sublane group (8 for f32,
    # 16 for bf16), spatial to a lane-dense multiple of 128.
    c_mult = (8 * 4) // itemsize
    C_pad = _round_up(C, c_mult)

    # Lane-dense HW tile sized so one (1, C_pad, tile) block ~ target_block_bytes:
    # 2-3 in-flight copies stay well inside every chip's scoped-VMEM budget.
    lanes_budget = max(128, target_block_bytes // (C_pad * itemsize) // 128 * 128)
    tile_hw = min(_round_up(HW, 128), lanes_budget)
    HW_pad = _round_up(HW, tile_hw)
    n_hw = HW_pad // tile_hw

    x3 = x.reshape(B, C, HW)
    if C_pad != C or HW_pad != HW:
        # Zero padding keeps the pooled mean (we divide by the real HW) and the
        # channel-conv zero-padding semantics exact.
        x3 = jnp.pad(x3, ((0, 0), (0, C_pad - C), (0, HW_pad - HW)))

    band = _band_matrix(jnp.asarray(weight, jnp.float32), C_pad)
    inv_hw = 1.0 / float(HW)

    if mode == "auto":
        mode = "fused" if C_pad * HW_pad * itemsize <= fused_max_slab_bytes else "two_stage"

    if mode == "fused":
        out3 = pl.pallas_call(
            functools.partial(_fused_kernel, inv_hw=inv_hw),
            out_shape=jax.ShapeDtypeStruct((B, C_pad, HW_pad), x.dtype),
            grid=(B,),
            in_specs=[
                pl.BlockSpec((C_pad, C_pad), lambda b: (0, 0)),
                pl.BlockSpec((1, C_pad, HW_pad), lambda b: (b, 0, 0)),
            ],
            out_specs=pl.BlockSpec((1, C_pad, HW_pad), lambda b: (b, 0, 0)),
            compiler_params=pltpu.CompilerParams(
                dimension_semantics=("parallel",),
                vmem_limit_bytes=_VMEM_LIMIT_BYTES),
        )(band, x3)
    elif mode == "two_stage":
        # Deepen the input pipeline only when there are enough HW tiles to benefit.
        x_spec_kwargs = dict(pipeline_mode=pl.Buffered(3)) if n_hw >= 3 else {}
        x_block = pl.BlockSpec((1, C_pad, tile_hw), lambda b, t: (b, 0, t),
                               **x_spec_kwargs)

        # Stage 1: tiled spatial reduction -> mean -> channel conv -> sigmoid gate.
        gate = pl.pallas_call(
            functools.partial(_pool_gate_kernel, inv_hw=inv_hw),
            out_shape=jax.ShapeDtypeStruct((B, C_pad, 1), x.dtype),
            grid=(B, n_hw),
            in_specs=[
                pl.BlockSpec((C_pad, C_pad), lambda b, t: (0, 0)),
                x_block,
            ],
            out_specs=pl.BlockSpec((1, C_pad, 1), lambda b, t: (b, 0, 0)),
            scratch_shapes=[pltpu.VMEM((1, C_pad), jnp.float32)],
            compiler_params=pltpu.CompilerParams(
                dimension_semantics=("parallel", "arbitrary"),
                vmem_limit_bytes=_VMEM_LIMIT_BYTES),
        )(band, x3)

        # Stage 2: pure broadcast-multiply; both grid axes parallel (megacore).
        out3 = pl.pallas_call(
            _scale_kernel,
            out_shape=jax.ShapeDtypeStruct((B, C_pad, HW_pad), x.dtype),
            grid=(B, n_hw),
            in_specs=[
                pl.BlockSpec((1, C_pad, 1), lambda b, t: (b, 0, 0)),
                x_block,
            ],
            out_specs=pl.BlockSpec((1, C_pad, tile_hw), lambda b, t: (b, 0, t)),
            compiler_params=pltpu.CompilerParams(
                dimension_semantics=("parallel", "parallel"),
                vmem_limit_bytes=_VMEM_LIMIT_BYTES),
        )(gate, x3)
    else:
        raise ValueError(f"unknown mode: {mode}")

    if C_pad != C or HW_pad != HW:
        out3 = out3[:, :C, :HW]
    return out3.reshape(B, C, H, W)


def eca_reference(x, weight):
    """Pure-JAX reference mirroring the PyTorch forward."""
    k = weight.shape[0]
    pad = (k - 1) // 2
    y = jnp.mean(x.astype(jnp.float32), axis=(2, 3))          # (B, C)
    y_pad = jnp.pad(y, ((0, 0), (pad, pad)))
    conv = sum(weight[j] * y_pad[:, j:j + y.shape[1]] for j in range(k))
    gate = jax.nn.sigmoid(conv)                                # (B, C)
    return (x.astype(jnp.float32) * gate[:, :, None, None]).astype(x.dtype)


if __name__ == "__main__":
    root = jax.random.PRNGKey(0)

    configs = [
        ((2, 4, 16, 16), 3),   # primary small shape from the spec
        ((1, 8, 32, 32), 3),   # multi-tile reduction + 3-deep buffered input path
        ((2, 6, 10, 10), 5),   # unaligned C / HW -> exercises padding, k = 5
    ]
    for idx, (shape, k_size) in enumerate(configs):
        kx, kw = jax.random.split(jax.random.fold_in(root, idx))
        x = jax.random.normal(kx, shape, dtype=jnp.float32)
        bound = 1.0 / (k_size ** 0.5)          # Conv1d kaiming-uniform-style bound
        weight = jax.random.uniform(kw, (k_size,), jnp.float32, -bound, bound)

        ref = eca_reference(x, weight)
        outs = {
            "fused": eca_forward(x, weight, mode="fused"),
            # Small target block forces several lane-dense HW tiles so the tiled
            # reduction + broadcast-multiply path is exercised as well.
            "two_stage": eca_forward(x, weight, mode="two_stage",
                                     target_block_bytes=4096),
        }
        for name, out in outs.items():
            out = jax.block_until_ready(out)
            assert out.shape == x.shape and out.dtype == x.dtype, (name, shape)
            assert jnp.allclose(out, ref, atol=1e-5, rtol=1e-5), (name, shape)

    print("KERNEL_OK")
</pallas_src>

<mosaic_0001>
module attributes {stable_mosaic.version = 11 : i64} {
  func.func @_fused_kernel(%arg0: i32, %arg1: memref<8x8xf32, #tpu.memory_space<vmem>>, %arg2: memref<1x8x256xf32, #tpu.memory_space<vmem>>, %arg3: memref<1x8x256xf32, #tpu.memory_space<vmem>>) attributes {dimension_semantics = [#tpu.dimension_semantics<parallel>], iteration_bounds = array<i64: 2>, scalar_prefetch = 0 : i64, scratch_operands = 0 : i64, tpu.core_type = #tpu.core_type<tc>, window_params = [{pipeline_mode = #tpu.pipeline_mode<synchronous>, transform_indices = @transform_0, window_bounds = array<i64: 8, 8>}, {transform_indices = @transform_1, window_bounds = array<i64: 1, 8, 256>}, {transform_indices = @transform_2, window_bounds = array<i64: 1, 8, 256>}]} {
    %c0 = arith.constant 0 : index
    %c0_0 = arith.constant 0 : index
    %c0_1 = arith.constant 0 : index
    %0 = vector.load %arg2[%c0, %c0_0, %c0_1] : memref<1x8x256xf32, #tpu.memory_space<vmem>>, vector<1x8x256xf32>
    %cst = arith.constant dense<0.000000e+00> : vector<1x8xf32>
    %1 = vector.multi_reduction <add>, %0, %cst [2] : vector<1x8x256xf32> to vector<1x8xf32>
    %cst_2 = arith.constant 3.906250e-03 : f32
    %2 = vector.broadcast %cst_2 : f32 to vector<1x8xf32>
    %3 = arith.mulf %1, %2 : vector<1x8xf32>
    %c0_3 = arith.constant 0 : index
    %c0_4 = arith.constant 0 : index
    %4 = vector.load %arg1[%c0_3, %c0_4] : memref<8x8xf32, #tpu.memory_space<vmem>>, vector<8x8xf32>
    %cst_5 = arith.constant dense<0.000000e+00> : vector<1x8xf32>
    %5 = tpu.matmul %3, %4, %cst_5 {dimension_numbers = #tpu.dot_dimension_numbers<[1], [0], [0], [1], [0, 0, 1, 1], [], []>} : vector<1x8xf32>, vector<8x8xf32>, vector<1x8xf32> -> vector<1x8xf32>
    %6 = arith.negf %5 : vector<1x8xf32>
    %7 = math.exp %6 : vector<1x8xf32>
    %cst_6 = arith.constant 1.000000e+00 : f32
    %8 = vector.broadcast %cst_6 : f32 to vector<1x8xf32>
    %9 = arith.addf %8, %7 : vector<1x8xf32>
    %10 = arith.divf %8, %9 : vector<1x8xf32>
    %11 = vector.shape_cast %10 : vector<1x8xf32> to vector<1x8x1xf32>
    %12 = vector.broadcast %11 : vector<1x8x1xf32> to vector<1x8x256xf32>
    %13 = arith.mulf %0, %12 : vector<1x8x256xf32>
    %c0_7 = arith.constant 0 : index
    %c0_8 = arith.constant 0 : index
    %c0_9 = arith.constant 0 : index
    %14 = vector.load %arg3[%c0_7, %c0_8, %c0_9] : memref<1x8x256xf32, #tpu.memory_space<vmem>>, vector<1x8x256xf32>
    tpu.vector_store %arg3[%c0_7, %c0_8, %c0_9], %13 {strides = array<i32>} : memref<1x8x256xf32, #tpu.memory_space<vmem>>, vector<1x8x256xf32>,
    return
  }
  func.func @transform_0(%arg0: i32) -> (i32, i32) {
    %c0_i32 = arith.constant 0 : i32
    %c0_i32_0 = arith.constant 0 : i32
    %c0_i32_1 = arith.constant 0 : i32
    return %c0_i32, %c0_i32_0 : i32, i32
  }
  func.func @transform_1(%arg0: i32) -> (i32, i32, i32) {
    %c0_i32 = arith.constant 0 : i32
    %c0_i32_0 = arith.constant 0 : i32
    %c0_i32_1 = arith.constant 0 : i32
    return %arg0, %c0_i32, %c0_i32_0 : i32, i32, i32
  }
  func.func @transform_2(%arg0: i32) -> (i32, i32, i32) {
    %c0_i32 = arith.constant 0 : i32
    %c0_i32_0 = arith.constant 0 : i32
    %c0_i32_1 = arith.constant 0 : i32
    return %arg0, %c0_i32, %c0_i32_0 : i32, i32, i32
  }
}

</mosaic_0001>

<llo_original>
// kernel: tpu_custom_call.1
$region0: #{tpu_custom_call.1}
  #allocation0 [shape = 'u32[]', space=smem, size = 0x4, offset = 0x4, fixed_abs, tag = 'smem constant byte address 0x4 - core index']
  #allocation1 [shape = 'u32[72,128]{1,0:T(1,128)}', space=vmem, size = 0x9000, scoped, tag = 'internal scratch']
  %s0 = inlined_call_operand.hbm [shape: f32[8,8], index: 0, kind: input, shape index: {}]
  %s1 = inlined_call_operand.hbm [shape: f32[2,8,256], index: 1, kind: input, shape index: {}]
  %s2 = inlined_call_operand.hbm [shape: f32[2,8,256], index: 2, kind: output, shape index: {}]
  %s3 = sld [smem:[#allocation0]]
  $region49: #{tpu_custom_call.1} parent=0
    _
  %s5 = ssub.s32 1, %s3
  %s6 = scalar_select 0, %s5, %s3
  $region1: #{tpu_custom_call.1} parent=0
    #allocation2 [shape = 'u8[4096]{0}', space=vmem, size = 0x1000, scoped, tag = 'input window, operand 0, single buffered']
    #allocation3 [shape = 's32[2]{0}', space=sflag, size = 0x8, scoped, tag = 'scoped memory for tpu_custom_call.1']
    #allocation4 [shape = 's32[2]{0}', space=sflag, size = 0x8, scoped, tag = 'scoped memory for tpu_custom_call.1']
    #allocation5 [shape = 'u8[16384]{0}', space=vmem, size = 0x4000, scoped, tag = 'input window, operand 1']
    #allocation6 [shape = 's32[2]{0}', space=sflag, size = 0x8, scoped, tag = 'scoped memory for tpu_custom_call.1']
    #allocation7 [shape = 'u8[16384]{0}', space=vmem, size = 0x4000, scoped, tag = 'output window, operand 0']
    %7 = vsyncpa [#allocation3], 0
    %8 = vsyncpa [#allocation6], 0
    %s9 = scalar_lea.sflag [#allocation6], 1
    %10 = vsyncpa %s9, 0
    %11 = vsyncpa [#allocation4], 0
    %s12 = scalar_lea.sflag [#allocation4], 1
    %13 = vsyncpa %s12, 0
    loop: start=0, step=1, limit=4
    $region2: #{tpu_custom_call.1} parent=1 // loop_pre_header
      _
    $region3: #{tpu_custom_call.1} parent=1 // loop_header
      %s15 = sphi 0, %s19
      %p16 = scmp.ge.s32.totalorder %s15, 4
      %s23 = sphi 0, %s23
      %s25 = sphi 0, %s23
      %s26 = sphi 0, %s25
      %s40 = sphi 0, %s26
      %s46 = sphi 0, %s48
      %s49 = sphi 0, %s46
      %s50 = sphi 0, %s49
      %s66 = sphi 0, %s50
      %s72 = sphi 0, %s74
      %s75 = sphi 0, %s72
      %s76 = sphi 0, %s75
      %s92 = sphi 0, %s76
    $region4: #{tpu_custom_call.1} parent=1 // loop_header_branch
      %18 = sbr.rel (%p16) target = $region8
    $region5: #{tpu_custom_call.1} parent=1 // loop_body
      %s20 = ssub.s32 %s15, 1
      %s21 = ssub.s32 %s15, 2
      %s22 = sadd.s32 %s15, 1
      %s24 = sadd.s32 %s23, 1
      %p27 = scmp.eq.s32.totalorder %s15, 1
      %p28 = scmp.ne.s32.totalorder %s23, %s25
      %p29 = scmp.eq.s32.totalorder %s15, 0
      %p30 = por %p28, %p29
      %p31 = scmp.ne.s32.totalorder %s23, %s25
      %p32 = scmp.eq.s32.totalorder %s20, 1
      %p33 = por %p31, %p32
      %p34 = scmp.ne.s32.totalorder %s25, %s26
      %p35 = scmp.eq.s32.totalorder %s20, 0
      %p36 = por %p34, %p35
      %p37 = scmp.ne.s32.totalorder %s25, %s26
      %p38 = scmp.eq.s32.totalorder %s21, 1
      %p39 = por %p37, %p38
      %p41 = scmp.ne.s32.totalorder %s26, %s40
      %p42 = scmp.eq.s32.totalorder %s21, 0
      %p43 = por %p41, %p42
      %s44 = ssub.s32 %s15, %s22
      %p45 = scmp.eq.s32.totalorder %s44, 0
      %s47 = sadd.s32 %s46, 1
      %s48 = scalar_select %p45, %s46, %s47
      %p51 = pneg %p45
      %p52 = scmp.eq.s32.totalorder %s15, 1
      %p53 = por %p51, %p52
      %p54 = scmp.ne.s32.totalorder %s46, %s49
      %p55 = scmp.eq.s32.totalorder %s15, 0
      %p56 = por %p54, %p55
      %p57 = scmp.ne.s32.totalorder %s46, %s49
      %p58 = scmp.eq.s32.totalorder %s20, 1
      %p59 = por %p57, %p58
      %p60 = scmp.ne.s32.totalorder %s49, %s50
      %p61 = scmp.eq.s32.totalorder %s20, 0
      %p62 = por %p60, %p61
      %p63 = scmp.ne.s32.totalorder %s49, %s50
      %p64 = scmp.eq.s32.totalorder %s21, 1
      %p65 = por %p63, %p64
      %p67 = scmp.ne.s32.totalorder %s50, %s66
      %p68 = scmp.eq.s32.totalorder %s21, 0
      %p69 = por %p67, %p68
      %s70 = ssub.s32 %s15, %s22
      %p71 = scmp.eq.s32.totalorder %s70, 0
      %s73 = sadd.s32 %s72, 1
      %s74 = scalar_select %p71, %s72, %s73
      %p77 = pneg %p71
      %p78 = scmp.eq.s32.totalorder %s15, 1
      %p79 = por %p77, %p78
      %p80 = scmp.ne.s32.totalorder %s72, %s75
      %p81 = scmp.eq.s32.totalorder %s15, 0
      %p82 = por %p80, %p81
      %p83 = scmp.ne.s32.totalorder %s72, %s75
      %p84 = scmp.eq.s32.totalorder %s20, 1
      %p85 = por %p83, %p84
      %p86 = scmp.ne.s32.totalorder %s75, %s76
      %p87 = scmp.eq.s32.totalorder %s20, 0
      %p88 = por %p86, %p87
      %p89 = scmp.ne.s32.totalorder %s75, %s76
      %p90 = scmp.eq.s32.totalorder %s21, 1
      %p91 = por %p89, %p90
      %p93 = scmp.ne.s32.totalorder %s76, %s92
      %p94 = scmp.eq.s32.totalorder %s21, 0
      %p95 = por %p93, %p94
      %p96 = scmp.le.s32.totalorder 1, %s15
      %p97 = scmp.lt.s32.totalorder %s15, 3
      %p98 = pnand %p96, %p97
      %p99 = pneg %p98
      // Predicated region
      $region9: #{tpu_custom_call.1} parent=5 // pred_check
        _
      $region10: #{tpu_custom_call.1} parent=5 // pred_check_branch
        %101 = sbr.rel (%p98) target = $region12
      $region11: #{tpu_custom_call.1} parent=5 // pred_region
        %s102 = ssub.s32 %s15, 1
        // Predicated region
        $region13: #{tpu_custom_call.1} parent=11 // pred_check
          %p103 = pneg %p36
        $region14: #{tpu_custom_call.1} parent=11 // pred_check_branch
          %105 = sbr.rel (%p103) target = $region16
        $region15: #{tpu_custom_call.1} parent=11 // pred_region
          %107 = vsyncadd [#allocation3], 0
          %s109 = sshll.u32 %s0, 4
          %s110 = int_to_ptr.hbm [resolvable:$true] %s109
          %s111 = sshll.u32 [#allocation2], 4
          %s112 = int_to_ptr.vmem [resolvable:$true] %s111
          %114 = dma.hbm_to_vmem [thread:$0]  %s110, 128, %s112, [#allocation3]
        $region16: #{tpu_custom_call.1} parent=11 // pred_fallthru
          _
      $region12: #{tpu_custom_call.1} parent=5 // pred_fallthru
        _
      %p115 = scmp.lt.s32.totalorder %s15, 2
      // Predicated region
      $region17: #{tpu_custom_call.1} parent=5 // pred_check
        %p116 = pneg %p115
      $region18: #{tpu_custom_call.1} parent=5 // pred_check_branch
        %118 = sbr.rel (%p116) target = $region20
      $region19: #{tpu_custom_call.1} parent=5 // pred_region
        // Predicated region
        $region21: #{tpu_custom_call.1} parent=19 // pred_check
          %p119 = pneg %p56
        $region22: #{tpu_custom_call.1} parent=19 // pred_check_branch
          %121 = sbr.rel (%p119) target = $region24
        $region23: #{tpu_custom_call.1} parent=19 // pred_region
          %s122 = sand.u32 %s46, 1
          %s123 = scalar_lea.sflag [#allocation6], %s122
          %s124 = sand.u32 %s46, 1
          %s125 = smul.addr %s124, 16
          %s126 = scalar_lea.vmem [#allocation5], %s125
          %128 = vsyncadd %s123, 0
          %s129 = smul.addr %s15, 2
          %s130 = smul.addr %s129, 8
          %s131 = scalar_lea.hbm %s1, %s130
          %s133 = sshll.u32 %s131, 4
          %s134 = int_to_ptr.hbm [resolvable:$true] %s133
          %s135 = sshll.u32 %s126, 4
          %s136 = int_to_ptr.vmem [resolvable:$true] %s135
          %138 = dma.hbm_to_vmem [thread:$0]  %s134, 256, %s136, %s123
        $region24: #{tpu_custom_call.1} parent=19 // pred_fallthru
          _
      $region20: #{tpu_custom_call.1} parent=5 // pred_fallthru
        _
      %p139 = scmp.le.s32.totalorder 1, %s15
      %p140 = scmp.lt.s32.totalorder %s15, 3
      %p141 = pnand %p139, %p140
      %p142 = pneg %p141
      // Predicated region
      $region25: #{tpu_custom_call.1} parent=5 // pred_check
        _
      $region26: #{tpu_custom_call.1} parent=5 // pred_check_branch
        %144 = sbr.rel (%p141) target = $region28
      $region27: #{tpu_custom_call.1} parent=5 // pred_region
        %s145 = ssub.s32 %s15, 1
        // Predicated region
        $region29: #{tpu_custom_call.1} parent=27 // pred_check
          %p146 = pneg %p36
        $region30: #{tpu_custom_call.1} parent=27 // pred_check_branch
          %148 = sbr.rel (%p146) target = $region32
        $region31: #{tpu_custom_call.1} parent=27 // pred_region
          %150 = dma.done [#allocation3], 128
        $region32: #{tpu_custom_call.1} parent=27 // pred_fallthru
          _
        %s151 = sand.u32 %s49, 1
        %s152 = scalar_lea.sflag [#allocation6], %s151
        %s153 = sand.u32 %s49, 1
        %s154 = smul.addr %s153, 16
        %s155 = scalar_lea.vmem [#allocation5], %s154
        // Predicated region
        $region33: #{tpu_custom_call.1} parent=27 // pred_check
          %p156 = pneg %p62
        $region34: #{tpu_custom_call.1} parent=27 // pred_check_branch
          %158 = sbr.rel (%p156) target = $region36
        $region35: #{tpu_custom_call.1} parent=27 // pred_region
          %160 = dma.done %s152, 256
        $region36: #{tpu_custom_call.1} parent=27 // pred_fallthru
          _
        %p161 = pneg %p36
        %p162 = pneg %p33
        %s163 = sand.u32 %s49, 1
        %s164 = scalar_lea.sflag [#allocation6], %s163
        %s165 = sand.u32 %s49, 1
        %s166 = smul.addr %s165, 16
        %s167 = scalar_lea.vmem [#allocation5], %s166
        %p168 = pneg %p62
        %p169 = pneg %p59
        %p170 = pneg %p88
        %p171 = pneg %p85
        %s172 = sand.u32 %s75, 1
        %s173 = scalar_lea.sflag [#allocation4], %s172
        %s174 = sand.u32 %s75, 1
        %s175 = smul.addr %s174, 16
        %s176 = scalar_lea.vmem [#allocation7], %s175
        %v177 = vld [vmem:[%s155] sm:$0xff]
        %v178 = vld [vmem:[%s155 + $0x8] sm:$0xff]
        %v179 = vadd.f32 %v177, %v178
        %180 = vadd.xlane.f32.xlu0 %v179
        %v181 = vpop.xlane.xlu0 %180
        %v182 = vmul.f32 %v181, 0.00390625
        %v183 = vld [vmem:[#allocation2] sm:$0xff]
        %v185 = vlaneseq
        %v186 = vand.u32 %v185, 127
        %v187 = vperm.slane %v182, %v186
        %vm188 = vcmask 64512
        %v189 = vsel %vm188, %v187, 0
        %191 = vmatpush.msra.mxu0 0.0
        %192 = vmatpush.msra.mxu0 0.0
        %193 = vmatpush.msra.mxu0 0.0
        %194 = vmatpush.msra.mxu0 0.0
        %195 = vmatpush.msra.mxu0 0.0
        %196 = vmatpush.msra.mxu0 0.0
        %197 = vmatpush.msra.mxu0 0.0
        %198 = vmatpush.msra.mxu0 0.0
        %199 = vmatpush.msra.mxu0 0.0
        %200 = vmatpush.msra.mxu0 0.0
        %201 = vmatpush.msra.mxu0 0.0
        %202 = vmatpush.msra.mxu0 0.0
        %203 = vmatpush.msra.mxu0 0.0
        %204 = vmatpush.msra.mxu0 0.0
        %205 = vmatpush.msra.mxu0 0.0
        %206 = vmatpush.msra.mxu0 %v183
        %207 = vmatmul.f32.gmra.mxu0 %v189
        %v208 = vpop.f32.mrf.mxu0
        %v209 = vadd.f32 0.0, %v208
        %210 = vdwg.mxu0
        %v211 = vxor.u32 %v209, 2147483648
        %v212 = vmul.f32 %v211, 1.442695
        %v213 = vpow.pop %v212
        %v214 = vadd.f32 %v213, 1.0
        %v215 = vrcp.pop %v214
        %v216 = vmul.f32 %v214, %v215
        %v217 = vsub.f32 1.0, %v216
        %v218 = vmul.f32 %v215, %v217
        %v219 = vadd.f32 %v215, %v218
        %vm220 = vweird.f32 %v214
        %vm221 = vweird.f32 %v215
        %vm222 = vmor %vm220, %vm221
        %v223 = vsel %vm222, %v215, %v219
        %v224 = vand.u32 2147483647, %v214
        %vm225 = vcmp.eq.f32.partialorder %v224, 8.507059e+37
        %v226 = vand.u32 %v214, 2147483648
        %v227 = vor.u32 1.1754944e-38, %v226
        %v228 = vsel %vm225, %v227, %v223
        %v229 = vmul.f32 1.0, %v228
        %v230 = vperm.slane %v229, 0
        %v231 = vlaneseq
        %v232 = vshrl.u32 %v231, 7
        %234 = vset.pattern.permute.xlu0 %v232
        %235 = vperm.xlu0 %234, %v230
        %v236 = vpop.permute.xlu0 %235
        %v237 = vmul.f32 %v177, %v236
        %v238 = vmul.f32 %v178, %v236
        %239 = vst [vmem:[%s176] sm:$0xff] %v237
        %240 = vst [vmem:[%s176 + $0x8] sm:$0xff] %v238
        %s241 = sand.u32 %s75, 1
        %s242 = scalar_lea.sflag [#allocation4], %s241
        %s243 = sand.u32 %s75, 1
        %s244 = smul.addr %s243, 16
        %s245 = scalar_lea.vmem [#allocation7], %s244
        // Predicated region
        $region37: #{tpu_custom_call.1} parent=27 // pred_check
          %p246 = pneg %p85
        $region38: #{tpu_custom_call.1} parent=27 // pred_check_branch
          %248 = sbr.rel (%p246) target = $region40
        $region39: #{tpu_custom_call.1} parent=27 // pred_region
          %250 = vsyncadd %s242, 0
          %s251 = smul.addr %s20, 2
          %s252 = smul.addr %s251, 8
          %s253 = scalar_lea.hbm %s2, %s252
          %s255 = sshll.u32 %s245, 4
          %s256 = int_to_ptr.vmem [resolvable:$true] %s255
          %s257 = sshll.u32 %s253, 4
          %s258 = int_to_ptr.hbm [resolvable:$true] %s257
          %260 = dma.vmem_to_hbm [thread:$0]  %s256, 256, %s258, %s242
        $region40: #{tpu_custom_call.1} parent=27 // pred_fallthru
          _
      $region28: #{tpu_custom_call.1} parent=5 // pred_fallthru
        _
      %p261 = scmp.le.s32.totalorder 2, %s15
      // Predicated region
      $region41: #{tpu_custom_call.1} parent=5 // pred_check
        %p262 = pneg %p261
      $region42: #{tpu_custom_call.1} parent=5 // pred_check_branch
        %264 = sbr.rel (%p262) target = $region44
      $region43: #{tpu_custom_call.1} parent=5 // pred_region
        %s265 = ssub.s32 %s15, 2
        // Predicated region
        $region45: #{tpu_custom_call.1} parent=43 // pred_check
          %p266 = pneg %p91
        $region46: #{tpu_custom_call.1} parent=43 // pred_check_branch
          %268 = sbr.rel (%p266) target = $region48
        $region47: #{tpu_custom_call.1} parent=43 // pred_region
          %s269 = sand.u32 %s76, 1
          %s270 = scalar_lea.sflag [#allocation4], %s269
          %s271 = sand.u32 %s76, 1
          %s272 = smul.addr %s271, 16
          %s273 = scalar_lea.vmem [#allocation7], %s272
          %275 = dma.done %s270, 256
        $region48: #{tpu_custom_call.1} parent=43 // pred_fallthru
          _
      $region44: #{tpu_custom_call.1} parent=5 // pred_fallthru
        _
    $region6: #{tpu_custom_call.1} parent=1 // loop_footer
      %s19 = sadd.s32 1, %s15
    $region7: #{tpu_custom_call.1} parent=1 // loop_footer_branch
      %14 = sbr.rel target = $region3
    $region8: #{tpu_custom_call.1} parent=1 // loop_exit
      _
    %276 = vsyncpa [#allocation3], 1
    %s277 = scalar_lea.sflag [#allocation3], 1
    %278 = vsyncpa %s277, 1
    %279 = vsyncpa [#allocation6], 1
    %s280 = scalar_lea.sflag [#allocation6], 1
    %281 = vsyncpa %s280, 1
    %282 = vsyncpa [#allocation4], 1
    %s283 = scalar_lea.sflag [#allocation4], 1
    %284 = vsyncpa %s283, 1

</llo_original>
